<compile_context>
chip_gen: v7x
topology: tpu7x:2x2x1
jax: 0.10.0
libtpu: 0.0.40
codegen_flags: <defaults>
</compile_context>

<pallas_src>
import jax
import jax.numpy as jnp
from jax import lax
from jax.experimental import pallas as pl
from jax.experimental.pallas import tpu as pltpu


def _gather_concat_kernel(idx_ref,     # (TBp, 2*P) int32: per packed row, the 2*P
                                       #   combined-table row ids (disjoint blocks)
                          table_ref,   # (P*(nf+na), P*2*D) block-diagonal table, VMEM-resident
                          out_ref):    # (TBp, P*2*D) lane-dense output tile
    tbp = out_ref.shape[0]
    k = table_ref.shape[0]
    idx = idx_ref[...]                                       # (TBp, 2P) int32

    # Multi-hot selector: 2P ones per row, each hitting a disjoint row-block of
    # the block-diagonal table (so column blocks never collide).
    iota = lax.broadcasted_iota(jnp.int32, (tbp, k), 1)      # hoisted, reused
    hot = (idx[:, 0:1] == iota).astype(jnp.float32)
    for c in range(1, idx.shape[1]):                         # static unroll, 2P-1 iters
        hot = hot + (idx[:, c:c + 1] == iota).astype(jnp.float32)

    # One MXU matmul produces the packed (TBp, P*2D) slab; HIGHEST precision keeps
    # the 0/1-weighted gather bit-exact vs. a real table lookup.
    out_ref[...] = jnp.dot(
        hot, table_ref[...],
        preferred_element_type=jnp.float32,
        precision=lax.Precision.HIGHEST,
    ).astype(out_ref.dtype)


def _round_up(x, m):
    return ((x + m - 1) // m) * m


def user_yelp_forward(fans_idx, avgrating_idx, fans_table, avgrating_table, *, tb=2048):
    """Pallas equivalent of user_yelp.forward.

    fans_idx, avgrating_idx : int (batch,)
    fans_table              : f32 (num_fans, D)
    avgrating_table         : f32 (num_avgrating, D)
    returns                 : f32 (batch, 2*D)  == cat([fans_emb, avgrating_emb], 1)
    """
    batch = fans_idx.shape[0]
    nf, d = fans_table.shape
    na, d2 = avgrating_table.shape
    assert d2 == d
    assert avgrating_idx.shape[0] == batch

    w = 2 * d                # output row width
    k_base = nf + na         # combined-table rows per packing slot

    # ---- lane-dense packing factor ----------------------------------------
    if w % 128 == 0:
        pack = 1             # already lane-dense
    elif 128 % w == 0:
        pack = 128 // w      # pack P rows -> stored width P*w is a multiple of 128
    else:
        pack = 1             # TODO(synk): w neither divides nor is divided by 128
                             #   -> accept masked stores for this odd embedding_dim.
    row_align = 8 * pack     # batch tile must keep TBp = tb/pack a multiple of 8

    # ---- choose batch tile --------------------------------------------------
    padded_min = _round_up(batch, row_align)
    # Budget the double-buffered output tile to ~8 MiB of VMEM (v7x has the
    # smallest budget: 64 MiB physical / 32 MiB default-scoped).
    max_tb = max(row_align, ((8 << 20) // (2 * w * 4)) // row_align * row_align)
    tb = max(row_align, min(_round_up(tb, row_align), max_tb, padded_min))
    # Prefer >= 2 grid steps when there is enough work so the "parallel" grid
    # axis can be sharded across both v7x TensorCores.
    if padded_min <= tb and padded_min >= 2 * row_align:
        tb = _round_up(pl.cdiv(padded_min, 2), row_align)
    padded = _round_up(batch, tb)
    tbp = tb // pack

    # ---- wrapper-side table prep: block-diagonal combined table ------------
    combined = jnp.zeros((k_base, w), fans_table.dtype)
    combined = combined.at[:nf, :d].set(fans_table)
    combined = combined.at[nf:, d:].set(avgrating_table)
    if pack == 1:
        table = combined
    else:
        table = jnp.zeros((pack * k_base, pack * w), fans_table.dtype)
        for p in range(pack):
            table = table.at[p * k_base:(p + 1) * k_base, p * w:(p + 1) * w].set(combined)

    # ---- wrapper-side index prep: offsets + packing layout ------------------
    fi = jnp.asarray(fans_idx, jnp.int32)
    ai = jnp.asarray(avgrating_idx, jnp.int32) + jnp.int32(nf)   # into combined rows
    if padded != batch:
        # Pad with index 0 (always valid); padded rows are sliced off below.
        fi = jnp.pad(fi, (0, padded - batch))
        ai = jnp.pad(ai, (0, padded - batch))
    idx = jnp.stack([fi, ai], axis=1)                      # (padded, 2)
    idx = idx.reshape(padded // pack, pack, 2)             # slot p <- original row r*pack+p
    slot_off = (jnp.arange(pack, dtype=jnp.int32) * k_base)[None, :, None]
    idx = (idx + slot_off).reshape(padded // pack, 2 * pack)

    grid_spec = pltpu.PrefetchScalarGridSpec(
        num_scalar_prefetch=0,
        grid=(padded // tb,),
        in_specs=[
            # Per-tile packed index slice.
            pl.BlockSpec((tbp, 2 * pack), lambda i: (i, 0)),
            # Block-diagonal table fully resident in VMEM across all grid steps.
            # (Tiny tables -> the redundant second pipeline buffer is negligible;
            #  would use pipeline_mode=pl.Buffered(1) if it ever mattered.)
            pl.BlockSpec(table.shape, lambda i: (0, 0)),
        ],
        out_specs=pl.BlockSpec((tbp, pack * w), lambda i: (i, 0)),
    )

    out = pl.pallas_call(
        _gather_concat_kernel,
        out_shape=jax.ShapeDtypeStruct((padded // pack, pack * w), fans_table.dtype),
        grid_spec=grid_spec,
        compiler_params=pltpu.CompilerParams(
            # Each output tile is written exactly once -> safe to shard across
            # TensorCores (helps v7x; neutral on v5e/v6e).
            dimension_semantics=("parallel",),
        ),
    )(idx, table)

    # Packed (padded/P, P*w) has the identical row-major bytes as (padded, w).
    return out.reshape(padded, w)[:batch]


if __name__ == "__main__":
    # Small config consistent with the module's __init__.
    num_fans = 10
    num_avgrating = 6
    embedding_dim = 32
    batch = 8

    key = jax.random.PRNGKey(0)
    k_fans, k_avg, k_if, k_ia = jax.random.split(key, 4)

    # nn.Embedding default init: N(0, 1)
    fans_table = jax.random.normal(k_fans, (num_fans, embedding_dim), dtype=jnp.float32)
    avgrating_table = jax.random.normal(
        k_avg, (num_avgrating, embedding_dim), dtype=jnp.float32)

    fans_idx = jax.random.randint(k_if, (batch,), 0, num_fans, dtype=jnp.int32)
    avgrating_idx = jax.random.randint(k_ia, (batch,), 0, num_avgrating, dtype=jnp.int32)

    out = user_yelp_forward(fans_idx, avgrating_idx, fans_table, avgrating_table)
    out = jax.block_until_ready(out)

    # Reference check in plain JAX (same semantics as the torch module).
    ref = jnp.concatenate(
        [fans_table[fans_idx], avgrating_table[avgrating_idx]], axis=1
    )
    assert out.shape == (batch, 2 * embedding_dim)
    assert jnp.allclose(out, ref), "mismatch vs reference"

    print("KERNEL_OK")
</pallas_src>

<mosaic_0001>
module attributes {stable_mosaic.version = 11 : i64} {
  func.func @_gather_concat_kernel(%arg0: i32, %arg1: memref<8x4xi32, #tpu.memory_space<vmem>>, %arg2: memref<32x128xf32, #tpu.memory_space<vmem>>, %arg3: memref<8x128xf32, #tpu.memory_space<vmem>>) attributes {dimension_semantics = [#tpu.dimension_semantics<parallel>], iteration_bounds = array<i64: 1>, scalar_prefetch = 0 : i64, scratch_operands = 0 : i64, tpu.core_type = #tpu.core_type<tc>, window_params = [{transform_indices = @transform_0, window_bounds = array<i64: 8, 4>}, {pipeline_mode = #tpu.pipeline_mode<synchronous>, transform_indices = @transform_1, window_bounds = array<i64: 32, 128>}, {transform_indices = @transform_2, window_bounds = array<i64: 8, 128>}]} {
    %c0 = arith.constant 0 : index
    %c0_0 = arith.constant 0 : index
    %0 = vector.load %arg1[%c0, %c0_0] : memref<8x4xi32, #tpu.memory_space<vmem>>, vector<8x4xi32>
    %1 = tpu.iota {dimensions = array<i32: 1>} : vector<8x32xi32>
    %2 = vector.extract_strided_slice %0 {offsets = [0, 0], sizes = [8, 1], strides = [1, 1]} : vector<8x4xi32> to vector<8x1xi32>
    %3 = vector.broadcast %2 : vector<8x1xi32> to vector<8x32xi32>
    %4 = arith.cmpi eq, %3, %1 : vector<8x32xi32>
    %5 = arith.extui %4 : vector<8x32xi1> to vector<8x32xi32>
    %6 = arith.sitofp %5 : vector<8x32xi32> to vector<8x32xf32>
    %7 = vector.extract_strided_slice %0 {offsets = [0, 1], sizes = [8, 1], strides = [1, 1]} : vector<8x4xi32> to vector<8x1xi32>
    %8 = vector.broadcast %7 : vector<8x1xi32> to vector<8x32xi32>
    %9 = arith.cmpi eq, %8, %1 : vector<8x32xi32>
    %10 = arith.extui %9 : vector<8x32xi1> to vector<8x32xi32>
    %11 = arith.sitofp %10 : vector<8x32xi32> to vector<8x32xf32>
    %12 = arith.addf %6, %11 : vector<8x32xf32>
    %13 = vector.extract_strided_slice %0 {offsets = [0, 2], sizes = [8, 1], strides = [1, 1]} : vector<8x4xi32> to vector<8x1xi32>
    %14 = vector.broadcast %13 : vector<8x1xi32> to vector<8x32xi32>
    %15 = arith.cmpi eq, %14, %1 : vector<8x32xi32>
    %16 = arith.extui %15 : vector<8x32xi1> to vector<8x32xi32>
    %17 = arith.sitofp %16 : vector<8x32xi32> to vector<8x32xf32>
    %18 = arith.addf %12, %17 : vector<8x32xf32>
    %19 = vector.extract_strided_slice %0 {offsets = [0, 3], sizes = [8, 1], strides = [1, 1]} : vector<8x4xi32> to vector<8x1xi32>
    %20 = vector.broadcast %19 : vector<8x1xi32> to vector<8x32xi32>
    %21 = arith.cmpi eq, %20, %1 : vector<8x32xi32>
    %22 = arith.extui %21 : vector<8x32xi1> to vector<8x32xi32>
    %23 = arith.sitofp %22 : vector<8x32xi32> to vector<8x32xf32>
    %24 = arith.addf %18, %23 : vector<8x32xf32>
    %c0_1 = arith.constant 0 : index
    %c0_2 = arith.constant 0 : index
    %25 = vector.load %arg2[%c0_1, %c0_2] : memref<32x128xf32, #tpu.memory_space<vmem>>, vector<32x128xf32>
    %cst = arith.constant dense<0.000000e+00> : vector<8x128xf32>
    %26 = tpu.matmul %24, %25, %cst {dimension_numbers = #tpu.dot_dimension_numbers<[1], [0], [0], [1], [0, 0, 1, 1], [], []>, precision = #tpu.contract_precision<fp32>} : vector<8x32xf32>, vector<32x128xf32>, vector<8x128xf32> -> vector<8x128xf32>
    %c0_3 = arith.constant 0 : index
    %c0_4 = arith.constant 0 : index
    %27 = vector.load %arg3[%c0_3, %c0_4] : memref<8x128xf32, #tpu.memory_space<vmem>>, vector<8x128xf32>
    tpu.vector_store %arg3[%c0_3, %c0_4], %26 {strides = array<i32>} : memref<8x128xf32, #tpu.memory_space<vmem>>, vector<8x128xf32>,
    return
  }
  func.func @transform_0(%arg0: i32) -> (i32, i32) {
    %c0_i32 = arith.constant 0 : i32
    %c0_i32_0 = arith.constant 0 : i32
    return %arg0, %c0_i32 : i32, i32
  }
  func.func @transform_1(%arg0: i32) -> (i32, i32) {
    %c0_i32 = arith.constant 0 : i32
    %c0_i32_0 = arith.constant 0 : i32
    %c0_i32_1 = arith.constant 0 : i32
    return %c0_i32, %c0_i32_0 : i32, i32
  }
  func.func @transform_2(%arg0: i32) -> (i32, i32) {
    %c0_i32 = arith.constant 0 : i32
    %c0_i32_0 = arith.constant 0 : i32
    return %arg0, %c0_i32 : i32, i32
  }
}

</mosaic_0001>

<llo_original>
// kernel: tpu_custom_call.1
$region0: #{tpu_custom_call.1}
  #allocation0 [shape = 'u32[]', space=smem, size = 0x4, offset = 0x4, fixed_abs, tag = 'smem constant byte address 0x4 - core index']
  #allocation1 [shape = 'u32[144,128]{1,0:T(1,128)}', space=vmem, size = 0x12000, scoped, tag = 'internal scratch']
  %s0 = inlined_call_operand.vmem [shape: s32[8,4], index: 0, kind: input, shape index: {}]
  %s1 = inlined_call_operand.hbm [shape: f32[32,128], index: 1, kind: input, shape index: {}]
  %s2 = inlined_call_operand.hbm [shape: f32[8,128], index: 2, kind: output, shape index: {}]
  %s3 = sld [smem:[#allocation0]]
  $region22: #{tpu_custom_call.1} parent=0
    _
  %s5 = ssub.s32 1, %s3
  %s6 = scalar_select 0, %s5, %s3
  $region1: #{tpu_custom_call.1} parent=0
    #allocation2 [shape = 'u8[16384]{0}', space=vmem, size = 0x4000, scoped, tag = 'input window, operand 1, single buffered']
    #allocation3 [shape = 's32[1]{0}', space=sflag, size = 0x4, scoped, tag = 'scoped memory for tpu_custom_call.1']
    #allocation4 [shape = 's32[1]{0}', space=sflag, size = 0x4, scoped, tag = 'scoped memory for tpu_custom_call.1']
    #allocation5 [shape = 'u8[4096]{0}', space=vmem, size = 0x1000, scoped, tag = 'output window, operand 0, single buffered']
    %7 = vsyncpa [#allocation3], 0
    %8 = vsyncpa [#allocation4], 0
    // Predicated region
    $region2: #{tpu_custom_call.1} parent=1 // pred_check
      _
    $region3: #{tpu_custom_call.1} parent=1 // pred_check_branch
      %10 = sbr.rel (0) target = $region5
    $region4: #{tpu_custom_call.1} parent=1 // pred_region
      _
    $region5: #{tpu_custom_call.1} parent=1 // pred_fallthru
      _
    // Predicated region
    $region6: #{tpu_custom_call.1} parent=1 // pred_check
      _
    $region7: #{tpu_custom_call.1} parent=1 // pred_check_branch
      %12 = sbr.rel (0) target = $region9
    $region8: #{tpu_custom_call.1} parent=1 // pred_region
      %s14 = ssub.s32 512, 512
      %15 = vsyncadd [#allocation3], %s14
      %s16 = sshll.u32 [#allocation2], 4
      %s17 = int_to_ptr.vmem [resolvable:$true] %s16
      %22 = dma.hbm_to_vmem [thread:$0]  %s1, 512, %s17, [#allocation3], 128, 128, 8
    $region9: #{tpu_custom_call.1} parent=1 // pred_fallthru
      _
    // Predicated region
    $region10: #{tpu_custom_call.1} parent=1 // pred_check
      _
    $region11: #{tpu_custom_call.1} parent=1 // pred_check_branch
      %24 = sbr.rel (0) target = $region13
    $region12: #{tpu_custom_call.1} parent=1 // pred_region
      %25 = dma.done [#allocation3], 512
    $region13: #{tpu_custom_call.1} parent=1 // pred_fallthru
      _
    %v26 = vld [vmem:[%s0] sm:$0xff]
    %v27 = vlaneseq
    %v28 = vand.u32 %v27, 127
    %29 = vset.pattern.permute.xlu0 0
    %30 = vperm.xlu0 %29, %v26
    %v31 = vpop.permute.xlu0 %30
    %vm32 = vcmp.eq.s32.totalorder %v31, %v28
    %v33 = vsel %vm32, 1, 0
    %v34 = vcvt.s32.f32 %v33
    %35 = vset.pattern.permute.xlu0 1
    %36 = vperm.xlu0 %35, %v26
    %v37 = vpop.permute.xlu0 %36
    %vm38 = vcmp.eq.s32.totalorder %v37, %v28
    %v39 = vsel %vm38, 1, 0
    %v40 = vcvt.s32.f32 %v39
    %v41 = vadd.f32 %v34, %v40
    %42 = vset.pattern.permute.xlu0 2
    %43 = vperm.xlu0 %42, %v26
    %v44 = vpop.permute.xlu0 %43
    %vm45 = vcmp.eq.s32.totalorder %v44, %v28
    %v46 = vsel %vm45, 1, 0
    %v47 = vcvt.s32.f32 %v46
    %v48 = vadd.f32 %v41, %v47
    %49 = vset.pattern.permute.xlu0 3
    %50 = vperm.xlu0 %49, %v26
    %v51 = vpop.permute.xlu0 %50
    %vm52 = vcmp.eq.s32.totalorder %v51, %v28
    %v53 = vsel %vm52, 1, 0
    %v54 = vcvt.s32.f32 %v53
    %v55 = vadd.f32 %v48, %v54
    %v56 = vld [vmem:[#allocation2] sm:$0xff]
    %v57 = vld [vmem:[#allocation2 + $0x8] sm:$0xff]
    %v58 = vld [vmem:[#allocation2 + $0x10] sm:$0xff]
    %v59 = vld [vmem:[#allocation2 + $0x18] sm:$0xff]
    %vm60 = vcmask 261120
    %v62 = vsel %vm60, %v55, 0
    %64 = vmatprep.subr.mxu0 0.0
    %v65 = vand.u32 %v56, 4294901760
    %66 = vmatpush1.msra.mxu0 %v65
    %67 = vmatprep.subr.mxu0 0.0
    %v68 = vand.u32 %v57, 4294901760
    %69 = vmatpush1.msra.mxu0 %v68
    %70 = vmatprep.subr.mxu0 0.0
    %v71 = vand.u32 %v58, 4294901760
    %72 = vmatpush1.msra.mxu0 %v71
    %73 = vmatprep.subr.mxu0 0.0
    %v74 = vand.u32 %v59, 4294901760
    %75 = vmatpush1.msra.mxu0 %v74
    %76 = vmatprep.subr.mxu0 0.0
    %77 = vmatpush1.msra.mxu0 0.0
    %78 = vmatprep.subr.mxu0 0.0
    %79 = vmatpush1.msra.mxu0 0.0
    %80 = vmatprep.subr.mxu0 0.0
    %81 = vmatpush1.msra.mxu0 0.0
    %82 = vmatprep.subr.mxu0 0.0
    %83 = vmatpush1.msra.mxu0 0.0
    %84 = vmatprep.subr.mxu0 0.0
    %85 = vmatpush1.msra.mxu0 0.0
    %86 = vmatprep.subr.mxu0 0.0
    %87 = vmatpush1.msra.mxu0 0.0
    %88 = vmatprep.subr.mxu0 0.0
    %89 = vmatpush1.msra.mxu0 0.0
    %90 = vmatprep.subr.mxu0 0.0
    %91 = vmatpush1.msra.mxu0 0.0
    %92 = vmatprep.subr.mxu0 0.0
    %93 = vmatpush1.msra.mxu0 0.0
    %94 = vmatprep.subr.mxu0 0.0
    %95 = vmatpush1.msra.mxu0 0.0
    %96 = vmatprep.subr.mxu0 0.0
    %97 = vmatpush1.msra.mxu0 0.0
    %98 = vmatprep.subr.mxu0 0.0
    %99 = vmatpush1.msra.mxu0 0.0
    %100 = vmatprep.subr.mxu0 0.0
    %101 = vmatpush1.msra.mxu0 0.0
    %102 = vmatprep.subr.mxu0 0.0
    %103 = vmatpush1.msra.mxu0 0.0
    %104 = vmatprep.subr.mxu0 0.0
    %105 = vmatpush1.msra.mxu0 0.0
    %106 = vmatprep.subr.mxu0 0.0
    %107 = vmatpush1.msra.mxu0 0.0
    %108 = vmatprep.subr.mxu0 0.0
    %109 = vmatpush1.msra.mxu0 0.0
    %110 = vmatprep.subr.mxu0 0.0
    %111 = vmatpush1.msra.mxu0 0.0
    %112 = vmatprep.subr.mxu0 0.0
    %113 = vmatpush1.msra.mxu0 0.0
    %114 = vmatprep.subr.mxu0 0.0
    %115 = vmatpush1.msra.mxu0 0.0
    %116 = vmatprep.subr.mxu0 0.0
    %117 = vmatpush1.msra.mxu0 0.0
    %118 = vmatprep.subr.mxu0 0.0
    %119 = vmatpush1.msra.mxu0 0.0
    %120 = vmatprep.subr.mxu0 0.0
    %121 = vmatpush1.msra.mxu0 0.0
    %122 = vmatprep.subr.mxu0 0.0
    %123 = vmatpush1.msra.mxu0 0.0
    %124 = vmatprep.subr.mxu0 0.0
    %125 = vmatpush1.msra.mxu0 0.0
    %126 = vmatprep.subr.mxu0 0.0
    %127 = vmatpush1.msra.mxu0 0.0
    %128 = vmatprep.subr.mxu0 0.0
    %129 = vmatpush1.msra.mxu0 0.0
    %130 = vmatprep.subr.mxu0 0.0
    %131 = vmatpush1.msra.mxu0 0.0
    %132 = vmatprep.mubr.f32.mxu0 0.0
    %v133 = vand.u32 %v62, 4294901760
    %v134 = vsub.f32 %v62, %v133
    %v135 = vand.u32 %v134, 4294901760
    %v136 = vsub.f32 %v134, %v135
    %v137 = vand.u32 %v136, 4294901760
    %138 = vmatmul.mubr.f32.gmra.mrb[0].mxu0 %v137
    %v139 = vpop.f32.mrb[0].mxu0
    %v140 = vadd.f32 0.0, %v139
    %v141 = vpop.f32.mrb[0].mxu0
    %142 = vdwg.mxu0
    %143 = vmatprep.subr.mxu0 0.0
    %v144 = vand.u32 %v56, 4294901760
    %v145 = vsub.f32 %v56, %v144
    %v146 = vand.u32 %v145, 4294901760
    %v147 = vsub.f32 %v145, %v146
    %v148 = vand.u32 %v147, 4294901760
    %149 = vmatpush1.msra.mxu0 %v148
    %150 = vmatprep.subr.mxu0 0.0
    %v151 = vand.u32 %v57, 4294901760
    %v152 = vsub.f32 %v57, %v151
    %v153 = vand.u32 %v152, 4294901760
    %v154 = vsub.f32 %v152, %v153
    %v155 = vand.u32 %v154, 4294901760
    %156 = vmatpush1.msra.mxu0 %v155
    %157 = vmatprep.subr.mxu0 0.0
    %v158 = vand.u32 %v58, 4294901760
    %v159 = vsub.f32 %v58, %v158
    %v160 = vand.u32 %v159, 4294901760
    %v161 = vsub.f32 %v159, %v160
    %v162 = vand.u32 %v161, 4294901760
    %163 = vmatpush1.msra.mxu0 %v162
    %164 = vmatprep.subr.mxu0 0.0
    %v165 = vand.u32 %v59, 4294901760
    %v166 = vsub.f32 %v59, %v165
    %v167 = vand.u32 %v166, 4294901760
    %v168 = vsub.f32 %v166, %v167
    %v169 = vand.u32 %v168, 4294901760
    %170 = vmatpush1.msra.mxu0 %v169
    %171 = vmatprep.subr.mxu0 0.0
    %172 = vmatpush1.msra.mxu0 0.0
    %173 = vmatprep.subr.mxu0 0.0
    %174 = vmatpush1.msra.mxu0 0.0
    %175 = vmatprep.subr.mxu0 0.0
    %176 = vmatpush1.msra.mxu0 0.0
    %177 = vmatprep.subr.mxu0 0.0
    %178 = vmatpush1.msra.mxu0 0.0
    %179 = vmatprep.subr.mxu0 0.0
    %180 = vmatpush1.msra.mxu0 0.0
    %181 = vmatprep.subr.mxu0 0.0
    %182 = vmatpush1.msra.mxu0 0.0
    %183 = vmatprep.subr.mxu0 0.0
    %184 = vmatpush1.msra.mxu0 0.0
    %185 = vmatprep.subr.mxu0 0.0
    %186 = vmatpush1.msra.mxu0 0.0
    %187 = vmatprep.subr.mxu0 0.0
    %188 = vmatpush1.msra.mxu0 0.0
    %189 = vmatprep.subr.mxu0 0.0
    %190 = vmatpush1.msra.mxu0 0.0
    %191 = vmatprep.subr.mxu0 0.0
    %192 = vmatpush1.msra.mxu0 0.0
    %193 = vmatprep.subr.mxu0 0.0
    %194 = vmatpush1.msra.mxu0 0.0
    %195 = vmatprep.subr.mxu0 0.0
    %196 = vmatpush1.msra.mxu0 0.0
    %197 = vmatprep.subr.mxu0 0.0
    %198 = vmatpush1.msra.mxu0 0.0
    %199 = vmatprep.subr.mxu0 0.0
    %200 = vmatpush1.msra.mxu0 0.0
    %201 = vmatprep.subr.mxu0 0.0
    %202 = vmatpush1.msra.mxu0 0.0
    %203 = vmatprep.subr.mxu0 0.0
    %204 = vmatpush1.msra.mxu0 0.0
    %205 = vmatprep.subr.mxu0 0.0
    %206 = vmatpush1.msra.mxu0 0.0
    %207 = vmatprep.subr.mxu0 0.0
    %208 = vmatpush1.msra.mxu0 0.0
    %209 = vmatprep.subr.mxu0 0.0
    %210 = vmatpush1.msra.mxu0 0.0
    %211 = vmatprep.subr.mxu0 0.0
    %212 = vmatpush1.msra.mxu0 0.0
    %213 = vmatprep.subr.mxu0 0.0
    %214 = vmatpush1.msra.mxu0 0.0
    %215 = vmatprep.subr.mxu0 0.0
    %216 = vmatpush1.msra.mxu0 0.0
    %217 = vmatprep.subr.mxu0 0.0
    %218 = vmatpush1.msra.mxu0 0.0
    %219 = vmatprep.subr.mxu0 0.0
    %220 = vmatpush1.msra.mxu0 0.0
    %221 = vmatprep.subr.mxu0 0.0
    %222 = vmatpush1.msra.mxu0 0.0
    %223 = vmatprep.subr.mxu0 0.0
    %224 = vmatpush1.msra.mxu0 0.0
    %225 = vmatprep.subr.mxu0 0.0
    %226 = vmatpush1.msra.mxu0 0.0
    %227 = vmatprep.mubr.f32.mxu0 0.0
    %v228 = vand.u32 %v62, 4294901760
    %229 = vmatmul.mubr.f32.gmra.mrb[0].mxu0 %v228
    %v230 = vpop.f32.mrb[0].mxu0
    %v231 = vadd.f32 %v140, %v230
    %v232 = vpop.f32.mrb[0].mxu0
    %233 = vdwg.mxu0
    %234 = vmatprep.subr.mxu0 0.0
    %v235 = vand.u32 %v56, 4294901760
    %v236 = vsub.f32 %v56, %v235
    %237 = vmatpush1.msra.mxu0 %v236
    %238 = vmatprep.subr.mxu0 0.0
    %v239 = vand.u32 %v57, 4294901760
    %v240 = vsub.f32 %v57, %v239
    %241 = vmatpush1.msra.mxu0 %v240
    %242 = vmatprep.subr.mxu0 0.0
    %v243 = vand.u32 %v58, 4294901760
    %v244 = vsub.f32 %v58, %v243
    %245 = vmatpush1.msra.mxu0 %v244
    %246 = vmatprep.subr.mxu0 0.0
    %v247 = vand.u32 %v59, 4294901760
    %v248 = vsub.f32 %v59, %v247
    %249 = vmatpush1.msra.mxu0 %v248
    %250 = vmatprep.subr.mxu0 0.0
    %251 = vmatpush1.msra.mxu0 0.0
    %252 = vmatprep.subr.mxu0 0.0
    %253 = vmatpush1.msra.mxu0 0.0
    %254 = vmatprep.subr.mxu0 0.0
    %255 = vmatpush1.msra.mxu0 0.0
    %256 = vmatprep.subr.mxu0 0.0
    %257 = vmatpush1.msra.mxu0 0.0
    %258 = vmatprep.subr.mxu0 0.0
    %259 = vmatpush1.msra.mxu0 0.0
    %260 = vmatprep.subr.mxu0 0.0
    %261 = vmatpush1.msra.mxu0 0.0
    %262 = vmatprep.subr.mxu0 0.0
    %263 = vmatpush1.msra.mxu0 0.0
    %264 = vmatprep.subr.mxu0 0.0
    %265 = vmatpush1.msra.mxu0 0.0
    %266 = vmatprep.subr.mxu0 0.0
    %267 = vmatpush1.msra.mxu0 0.0
    %268 = vmatprep.subr.mxu0 0.0
    %269 = vmatpush1.msra.mxu0 0.0
    %270 = vmatprep.subr.mxu0 0.0
    %271 = vmatpush1.msra.mxu0 0.0
    %272 = vmatprep.subr.mxu0 0.0
    %273 = vmatpush1.msra.mxu0 0.0
    %274 = vmatprep.subr.mxu0 0.0
    %275 = vmatpush1.msra.mxu0 0.0
    %276 = vmatprep.subr.mxu0 0.0
    %277 = vmatpush1.msra.mxu0 0.0
    %278 = vmatprep.subr.mxu0 0.0
    %279 = vmatpush1.msra.mxu0 0.0
    %280 = vmatprep.subr.mxu0 0.0
    %281 = vmatpush1.msra.mxu0 0.0
    %282 = vmatprep.subr.mxu0 0.0
    %283 = vmatpush1.msra.mxu0 0.0
    %284 = vmatprep.subr.mxu0 0.0
    %285 = vmatpush1.msra.mxu0 0.0
    %286 = vmatprep.subr.mxu0 0.0
    %287 = vmatpush1.msra.mxu0 0.0
    %288 = vmatprep.subr.mxu0 0.0
    %289 = vmatpush1.msra.mxu0 0.0
    %290 = vmatprep.subr.mxu0 0.0
    %291 = vmatpush1.msra.mxu0 0.0
    %292 = vmatprep.subr.mxu0 0.0
    %293 = vmatpush1.msra.mxu0 0.0
    %294 = vmatprep.subr.mxu0 0.0
    %295 = vmatpush1.msra.mxu0 0.0
    %296 = vmatprep.subr.mxu0 0.0
    %297 = vmatpush1.msra.mxu0 0.0
    %298 = vmatprep.subr.mxu0 0.0
    %299 = vmatpush1.msra.mxu0 0.0
    %300 = vmatprep.subr.mxu0 0.0
    %301 = vmatpush1.msra.mxu0 0.0
    %302 = vmatprep.subr.mxu0 0.0
    %303 = vmatpush1.msra.mxu0 0.0
    %304 = vmatprep.subr.mxu0 0.0
    %305 = vmatpush1.msra.mxu0 0.0
    %306 = vmatprep.mubr.f32.mxu0 0.0
    %v307 = vand.u32 %v62, 4294901760
    %v308 = vsub.f32 %v62, %v307
    %309 = vmatmul.mubr.f32.gmra.mrb[0].mxu0 %v308
    %v310 = vpop.f32.mrb[0].mxu0
    %v311 = vadd.f32 %v231, %v310
    %v312 = vpop.f32.mrb[0].mxu0
    %313 = vdwg.mxu0
    %314 = vmatprep.subr.mxu0 0.0
    %v315 = vand.u32 %v56, 4294901760
    %316 = vmatpush1.msra.mxu0 %v315
    %317 = vmatprep.subr.mxu0 0.0
    %v318 = vand.u32 %v57, 4294901760
    %319 = vmatpush1.msra.mxu0 %v318
    %320 = vmatprep.subr.mxu0 0.0
    %v321 = vand.u32 %v58, 4294901760
    %322 = vmatpush1.msra.mxu0 %v321
    %323 = vmatprep.subr.mxu0 0.0
    %v324 = vand.u32 %v59, 4294901760
    %325 = vmatpush1.msra.mxu0 %v324
    %326 = vmatprep.subr.mxu0 0.0
    %327 = vmatpush1.msra.mxu0 0.0
    %328 = vmatprep.subr.mxu0 0.0
    %329 = vmatpush1.msra.mxu0 0.0
    %330 = vmatprep.subr.mxu0 0.0
    %331 = vmatpush1.msra.mxu0 0.0
    %332 = vmatprep.subr.mxu0 0.0
    %333 = vmatpush1.msra.mxu0 0.0
    %334 = vmatprep.subr.mxu0 0.0
    %335 = vmatpush1.msra.mxu0 0.0
    %336 = vmatprep.subr.mxu0 0.0
    %337 = vmatpush1.msra.mxu0 0.0
    %338 = vmatprep.subr.mxu0 0.0
    %339 = vmatpush1.msra.mxu0 0.0
    %340 = vmatprep.subr.mxu0 0.0
    %341 = vmatpush1.msra.mxu0 0.0
    %342 = vmatprep.subr.mxu0 0.0
    %343 = vmatpush1.msra.mxu0 0.0
    %344 = vmatprep.subr.mxu0 0.0
    %345 = vmatpush1.msra.mxu0 0.0
    %346 = vmatprep.subr.mxu0 0.0
    %347 = vmatpush1.msra.mxu0 0.0
    %348 = vmatprep.subr.mxu0 0.0
    %349 = vmatpush1.msra.mxu0 0.0
    %350 = vmatprep.subr.mxu0 0.0
    %351 = vmatpush1.msra.mxu0 0.0
    %352 = vmatprep.subr.mxu0 0.0
    %353 = vmatpush1.msra.mxu0 0.0
    %354 = vmatprep.subr.mxu0 0.0
    %355 = vmatpush1.msra.mxu0 0.0
    %356 = vmatprep.subr.mxu0 0.0
    %357 = vmatpush1.msra.mxu0 0.0
    %358 = vmatprep.subr.mxu0 0.0
    %359 = vmatpush1.msra.mxu0 0.0
    %360 = vmatprep.subr.mxu0 0.0
    %361 = vmatpush1.msra.mxu0 0.0
    %362 = vmatprep.subr.mxu0 0.0
    %363 = vmatpush1.msra.mxu0 0.0
    %364 = vmatprep.subr.mxu0 0.0
    %365 = vmatpush1.msra.mxu0 0.0
    %366 = vmatprep.subr.mxu0 0.0
    %367 = vmatpush1.msra.mxu0 0.0
    %368 = vmatprep.subr.mxu0 0.0
    %369 = vmatpush1.msra.mxu0 0.0
    %370 = vmatprep.subr.mxu0 0.0
    %371 = vmatpush1.msra.mxu0 0.0
    %372 = vmatprep.subr.mxu0 0.0
    %373 = vmatpush1.msra.mxu0 0.0
    %374 = vmatprep.subr.mxu0 0.0
    %375 = vmatpush1.msra.mxu0 0.0
    %376 = vmatprep.subr.mxu0 0.0
    %377 = vmatpush1.msra.mxu0 0.0
    %378 = vmatprep.subr.mxu0 0.0
    %379 = vmatpush1.msra.mxu0 0.0
    %380 = vmatprep.subr.mxu0 0.0
    %381 = vmatpush1.msra.mxu0 0.0
    %382 = vmatprep.mubr.f32.mxu0 0.0
    %v383 = vand.u32 %v62, 4294901760
    %v384 = vsub.f32 %v62, %v383
    %v385 = vand.u32 %v384, 4294901760
    %386 = vmatmul.mubr.f32.gmra.mrb[0].mxu0 %v385
    %v387 = vpop.f32.mrb[0].mxu0
    %v388 = vadd.f32 %v311, %v387
    %v389 = vpop.f32.mrb[0].mxu0
    %390 = vdwg.mxu0
    %391 = vmatprep.subr.mxu0 0.0
    %v392 = vand.u32 %v56, 4294901760
    %v393 = vsub.f32 %v56, %v392
    %v394 = vand.u32 %v393, 4294901760
    %395 = vmatpush1.msra.mxu0 %v394
    %396 = vmatprep.subr.mxu0 0.0
    %v397 = vand.u32 %v57, 4294901760
    %v398 = vsub.f32 %v57, %v397
    %v399 = vand.u32 %v398, 4294901760
    %400 = vmatpush1.msra.mxu0 %v399
    %401 = vmatprep.subr.mxu0 0.0
    %v402 = vand.u32 %v58, 4294901760
    %v403 = vsub.f32 %v58, %v402
    %v404 = vand.u32 %v403, 4294901760
    %405 = vmatpush1.msra.mxu0 %v404
    %406 = vmatprep.subr.mxu0 0.0
    %v407 = vand.u32 %v59, 4294901760
    %v408 = vsub.f32 %v59, %v407
    %v409 = vand.u32 %v408, 4294901760
    %410 = vmatpush1.msra.mxu0 %v409
    %411 = vmatprep.subr.mxu0 0.0
    %412 = vmatpush1.msra.mxu0 0.0
    %413 = vmatprep.subr.mxu0 0.0
    %414 = vmatpush1.msra.mxu0 0.0
    %415 = vmatprep.subr.mxu0 0.0
    %416 = vmatpush1.msra.mxu0 0.0
    %417 = vmatprep.subr.mxu0 0.0
    %418 = vmatpush1.msra.mxu0 0.0
    %419 = vmatprep.subr.mxu0 0.0
    %420 = vmatpush1.msra.mxu0 0.0
    %421 = vmatprep.subr.mxu0 0.0
    %422 = vmatpush1.msra.mxu0 0.0
    %423 = vmatprep.subr.mxu0 0.0
    %424 = vmatpush1.msra.mxu0 0.0
    %425 = vmatprep.subr.mxu0 0.0
    %426 = vmatpush1.msra.mxu0 0.0
    %427 = vmatprep.subr.mxu0 0.0
    %428 = vmatpush1.msra.mxu0 0.0
    %429 = vmatprep.subr.mxu0 0.0
    %430 = vmatpush1.msra.mxu0 0.0
    %431 = vmatprep.subr.mxu0 0.0
    %432 = vmatpush1.msra.mxu0 0.0
    %433 = vmatprep.subr.mxu0 0.0
    %434 = vmatpush1.msra.mxu0 0.0
    %435 = vmatprep.subr.mxu0 0.0
    %436 = vmatpush1.msra.mxu0 0.0
    %437 = vmatprep.subr.mxu0 0.0
    %438 = vmatpush1.msra.mxu0 0.0
    %439 = vmatprep.subr.mxu0 0.0
    %440 = vmatpush1.msra.mxu0 0.0
    %441 = vmatprep.subr.mxu0 0.0
    %442 = vmatpush1.msra.mxu0 0.0
    %443 = vmatprep.subr.mxu0 0.0
    %444 = vmatpush1.msra.mxu0 0.0
    %445 = vmatprep.subr.mxu0 0.0
    %446 = vmatpush1.msra.mxu0 0.0
    %447 = vmatprep.subr.mxu0 0.0
    %448 = vmatpush1.msra.mxu0 0.0
    %449 = vmatprep.subr.mxu0 0.0
    %450 = vmatpush1.msra.mxu0 0.0
    %451 = vmatprep.subr.mxu0 0.0
    %452 = vmatpush1.msra.mxu0 0.0
    %453 = vmatprep.subr.mxu0 0.0
    %454 = vmatpush1.msra.mxu0 0.0
    %455 = vmatprep.subr.mxu0 0.0
    %456 = vmatpush1.msra.mxu0 0.0
    %457 = vmatprep.subr.mxu0 0.0
    %458 = vmatpush1.msra.mxu0 0.0
    %459 = vmatprep.subr.mxu0 0.0
    %460 = vmatpush1.msra.mxu0 0.0
    %461 = vmatprep.subr.mxu0 0.0
    %462 = vmatpush1.msra.mxu0 0.0
    %463 = vmatprep.subr.mxu0 0.0
    %464 = vmatpush1.msra.mxu0 0.0
    %465 = vmatprep.subr.mxu0 0.0
    %466 = vmatpush1.msra.mxu0 0.0
    %467 = vmatprep.mubr.f32.mxu0 0.0
    %v468 = vand.u32 %v62, 4294901760
    %469 = vmatmul.mubr.f32.gmra.mrb[0].mxu0 %v468
    %v470 = vpop.f32.mrb[0].mxu0
    %v471 = vadd.f32 %v388, %v470
    %v472 = vpop.f32.mrb[0].mxu0
    %473 = vdwg.mxu0
    %474 = vmatprep.subr.mxu0 0.0
    %v475 = vand.u32 %v56, 4294901760
    %476 = vmatpush1.msra.mxu0 %v475
    %477 = vmatprep.subr.mxu0 0.0
    %v478 = vand.u32 %v57, 4294901760
    %479 = vmatpush1.msra.mxu0 %v478
    %480 = vmatprep.subr.mxu0 0.0
    %v481 = vand.u32 %v58, 4294901760
    %482 = vmatpush1.msra.mxu0 %v481
    %483 = vmatprep.subr.mxu0 0.0
    %v484 = vand.u32 %v59, 4294901760
    %485 = vmatpush1.msra.mxu0 %v484
    %486 = vmatprep.subr.mxu0 0.0
    %487 = vmatpush1.msra.mxu0 0.0
    %488 = vmatprep.subr.mxu0 0.0
    %489 = vmatpush1.msra.mxu0 0.0
    %490 = vmatprep.subr.mxu0 0.0
    %491 = vmatpush1.msra.mxu0 0.0
    %492 = vmatprep.subr.mxu0 0.0
    %493 = vmatpush1.msra.mxu0 0.0
    %494 = vmatprep.subr.mxu0 0.0
    %495 = vmatpush1.msra.mxu0 0.0
    %496 = vmatprep.subr.mxu0 0.0
    %497 = vmatpush1.msra.mxu0 0.0
    %498 = vmatprep.subr.mxu0 0.0
    %499 = vmatpush1.msra.mxu0 0.0
    %500 = vmatprep.subr.mxu0 0.0
    %501 = vmatpush1.msra.mxu0 0.0
    %502 = vmatprep.subr.mxu0 0.0
    %503 = vmatpush1.msra.mxu0 0.0
    %504 = vmatprep.subr.mxu0 0.0
    %505 = vmatpush1.msra.mxu0 0.0
    %506 = vmatprep.subr.mxu0 0.0
    %507 = vmatpush1.msra.mxu0 0.0
    %508 = vmatprep.subr.mxu0 0.0
    %509 = vmatpush1.msra.mxu0 0.0
    %510 = vmatprep.subr.mxu0 0.0
    %511 = vmatpush1.msra.mxu0 0.0
    %512 = vmatprep.subr.mxu0 0.0
    %513 = vmatpush1.msra.mxu0 0.0
    %514 = vmatprep.subr.mxu0 0.0
    %515 = vmatpush1.msra.mxu0 0.0
    %516 = vmatprep.subr.mxu0 0.0
    %517 = vmatpush1.msra.mxu0 0.0
    %518 = vmatprep.subr.mxu0 0.0
    %519 = vmatpush1.msra.mxu0 0.0
    %520 = vmatprep.subr.mxu0 0.0
    %521 = vmatpush1.msra.mxu0 0.0
    %522 = vmatprep.subr.mxu0 0.0
    %523 = vmatpush1.msra.mxu0 0.0
    %524 = vmatprep.subr.mxu0 0.0
    %525 = vmatpush1.msra.mxu0 0.0
    %526 = vmatprep.subr.mxu0 0.0
    %527 = vmatpush1.msra.mxu0 0.0
    %528 = vmatprep.subr.mxu0 0.0
    %529 = vmatpush1.msra.mxu0 0.0
    %530 = vmatprep.subr.mxu0 0.0
    %531 = vmatpush1.msra.mxu0 0.0
    %532 = vmatprep.subr.mxu0 0.0
    %533 = vmatpush1.msra.mxu0 0.0
    %534 = vmatprep.subr.mxu0 0.0
    %535 = vmatpush1.msra.mxu0 0.0
    %536 = vmatprep.subr.mxu0 0.0
    %537 = vmatpush1.msra.mxu0 0.0
    %538 = vmatprep.subr.mxu0 0.0
    %539 = vmatpush1.msra.mxu0 0.0
    %540 = vmatprep.subr.mxu0 0.0
    %541 = vmatpush1.msra.mxu0 0.0
    %542 = vmatprep.mubr.f32.mxu0 0.0
    %v543 = vand.u32 %v62, 4294901760
    %544 = vmatmul.mubr.f32.gmra.mrb[0].mxu0 %v543
    %v545 = vpop.f32.mrb[0].mxu0
    %v546 = vadd.f32 %v471, %v545
    %v547 = vpop.f32.mrb[0].mxu0
    %548 = vdwg.mxu0
    %549 = vst [vmem:[#allocation5] sm:$0xff] %v546
    // Predicated region
    $region14: #{tpu_custom_call.1} parent=1 // pred_check
      _
    $region15: #{tpu_custom_call.1} parent=1 // pred_check_branch
      %551 = sbr.rel (0) target = $region17
    $region16: #{tpu_custom_call.1} parent=1 // pred_region
      %s553 = ssub.s32 128, 128
      %554 = vsyncadd [#allocation4], %s553
      %s556 = sshll.u32 [#allocation5], 4
      %s557 = int_to_ptr.vmem [resolvable:$true] %s556
      %559 = dma.vmem_to_hbm [thread:$0]  %s557, 128, %s2, [#allocation4]
    $region17: #{tpu_custom_call.1} parent=1 // pred_fallthru
      _
    // Predicated region
    $region18: #{tpu_custom_call.1} parent=1 // pred_check
      _
    $region19: #{tpu_custom_call.1} parent=1 // pred_check_branch
      %561 = sbr.rel (0) target = $region21
    $region20: #{tpu_custom_call.1} parent=1 // pred_region
      %562 = dma.done [#allocation4], 128
    $region21: #{tpu_custom_call.1} parent=1 // pred_fallthru
      _
    %563 = vsyncpa [#allocation3], 1
    %564 = vsyncpa [#allocation4], 1

</llo_original>
